<compile_context>
chip_gen: v7x
topology: tpu7x:2x2x1
jax: 0.10.0
libtpu: 0.0.40
codegen_flags: <defaults>
</compile_context>

<pallas_src>
import math
from functools import partial

import jax
import jax.numpy as jnp
from jax import lax
from jax.experimental import pallas as pl
from jax.experimental.pallas import tpu as pltpu


# --------------------------- fused kernel (per batch) ---------------------------
def fused_mha_kernel(q_ref, key_ref, w_ref, b_ref, o_ref, aw_ref, *,
                     num_heads, head_dim, scaling):
    E = num_heads * head_dim

    # Fold the 1/sqrt(Dh) scaling into q once per grid step.
    q = q_ref[0] * scaling            # (T, E)
    key = key_ref[0]                  # (S, E)

    # kv projection fused in-kernel: result stays in VMEM / registers.
    kv = jnp.dot(key, w_ref[...], preferred_element_type=jnp.float32) + b_ref[...]
    k = kv[:, :E]                     # (S, E)
    v = kv[:, E:]                     # (S, E)

    head_outs = []
    w_sum = None
    # num_heads is small and static -> unrolled; all ops stay 2-D (robust lowering).
    for h in range(num_heads):
        lo = h * head_dim
        hi = lo + head_dim
        qh = q[:, lo:hi]              # (T, Dh)
        kh = k[:, lo:hi]              # (S, Dh)
        vh = v[:, lo:hi]              # (S, Dh)

        # Contract last dims directly (no explicit k.T relayout).
        s = lax.dot_general(qh, kh, (((1,), (1,)), ((), ())),
                            preferred_element_type=jnp.float32)   # (T, S)

        m = jnp.max(s, axis=-1, keepdims=True)
        p = jnp.exp(s - m)
        denom = jnp.sum(p, axis=-1, keepdims=True)
        # approx=False keeps the exact divide so the 1e-5 reference check holds.
        p = p * pl.reciprocal(denom, approx=False)

        w_sum = p if w_sum is None else w_sum + p
        head_outs.append(jnp.dot(p, vh, preferred_element_type=jnp.float32))  # (T, Dh)

    # One dense (T, E) store per batch; head-averaged weights written once.
    o_ref[0] = jnp.concatenate(head_outs, axis=-1)     # (T, E)
    aw_ref[0] = w_sum * (1.0 / num_heads)              # (T, S)


def fused_attention(q_bte, key_bse, kv_w, kv_b, num_heads, head_dim, scaling):
    B, T, E = q_bte.shape
    S = key_bse.shape[1]
    E2 = kv_w.shape[1]
    kernel = partial(fused_mha_kernel, num_heads=num_heads,
                     head_dim=head_dim, scaling=scaling)
    return pl.pallas_call(
        kernel,
        out_shape=(
            jax.ShapeDtypeStruct((B, T, E), jnp.float32),   # attention output (B-major)
            jax.ShapeDtypeStruct((B, T, S), jnp.float32),   # head-averaged weights
        ),
        grid=(B,),
        in_specs=[
            pl.BlockSpec((1, T, E), lambda b: (b, 0, 0)),   # q  (B, T, E)
            pl.BlockSpec((1, S, E), lambda b: (b, 0, 0)),   # key (B, S, E)
            pl.BlockSpec((E, E2), lambda b: (0, 0)),        # kv weight (resident)
            pl.BlockSpec((1, E2), lambda b: (0, 0)),        # kv bias (resident)
        ],
        out_specs=(
            pl.BlockSpec((1, T, E), lambda b: (b, 0, 0)),
            pl.BlockSpec((1, T, S), lambda b: (b, 0, 0)),
        ),
        compiler_params=pltpu.CompilerParams(
            dimension_semantics=("parallel",),              # shard batches across TCs (v7x)
        ),
    )(q_bte, key_bse, kv_w, kv_b)


# ------------------------------ module wrapper ---------------------------------
class MultiheadAttentionContextPallas:
    def __init__(self, embed_dim, num_heads, key):
        self.embed_dim = embed_dim
        self.num_heads = num_heads
        self.head_dim = embed_dim // num_heads
        assert self.head_dim * num_heads == embed_dim
        self.scaling = self.head_dim ** (-0.5)

        # kv_fc = nn.Linear(E, 2E), kaiming_uniform_(a=sqrt(1)) on weight,
        # default uniform(-1/sqrt(fan_in), 1/sqrt(fan_in)) on bias.
        kw, kb = jax.random.split(key)
        fan_in = embed_dim
        w_bound = math.sqrt(6.0 / ((1.0 + 1.0) * fan_in))
        b_bound = 1.0 / math.sqrt(fan_in)
        # Stored as (E, 2E) so the kernel does x @ W directly (== x @ W_torch.T).
        self.kv_w = jax.random.uniform(
            kw, (embed_dim, 2 * embed_dim), jnp.float32, -w_bound, w_bound
        )
        self.kv_b = jax.random.uniform(
            kb, (1, 2 * embed_dim), jnp.float32, -b_bound, b_bound
        )

    def __call__(self, q, key, value=None):
        # q: (T, B, E)    key: (S, B, E)
        T, B, E = q.shape

        # Only layout work left outside the kernel: make batch the leading dim
        # so each grid step owns a lane-dense (T, E) / (S, E) slab.
        q_bte = jnp.transpose(q, (1, 0, 2))      # (B, T, E)
        key_bse = jnp.transpose(key, (1, 0, 2))  # (B, S, E)

        attn_bte, attn_weights = fused_attention(
            q_bte, key_bse, self.kv_w, self.kv_b,
            self.num_heads, self.head_dim, self.scaling,
        )

        attn = jnp.transpose(attn_bte, (1, 0, 2))  # (T, B, E)
        return attn, attn_weights                  # attn_weights: (B, T, S)


# ------------------------------ pure-JAX reference -----------------------------
def reference_forward(mod, q, key):
    T, B, E = q.shape
    S = key.shape[0]
    H, Dh = mod.num_heads, mod.head_dim
    kv = key.reshape(S * B, E) @ mod.kv_w + mod.kv_b
    kv = kv.reshape(S, B, 2 * E)
    k, v = kv[..., :E], kv[..., E:]
    qh = (q * mod.scaling).reshape(T, B, H, Dh).transpose(1, 2, 0, 3)
    kh = k.reshape(S, B, H, Dh).transpose(1, 2, 0, 3)
    vh = v.reshape(S, B, H, Dh).transpose(1, 2, 0, 3)
    s = jnp.einsum("bhtd,bhsd->bhts", qh, kh)
    p = jax.nn.softmax(s, axis=-1)
    o = jnp.einsum("bhts,bhsd->bhtd", p, vh)
    attn = o.transpose(2, 0, 1, 3).reshape(T, B, E)
    w = p.sum(axis=1) / H
    return attn, w


# ------------------------------------ main --------------------------------------
if __name__ == "__main__":
    embed_dim, num_heads = 32, 4
    tgt_len, src_len, bsz = 8, 8, 2

    root = jax.random.PRNGKey(0)
    k_param, k_q, k_k = jax.random.split(root, 3)

    mod = MultiheadAttentionContextPallas(embed_dim, num_heads, k_param)

    q = jax.random.normal(k_q, (tgt_len, bsz, embed_dim), jnp.float32)
    key = jax.random.normal(k_k, (src_len, bsz, embed_dim), jnp.float32)

    attn, attn_weights = mod(q, key)
    attn = jax.block_until_ready(attn)
    attn_weights = jax.block_until_ready(attn_weights)

    ref_attn, ref_w = reference_forward(mod, q, key)
    assert attn.shape == (tgt_len, bsz, embed_dim)
    assert attn_weights.shape == (bsz, tgt_len, src_len)
    assert jnp.allclose(attn, ref_attn, atol=1e-5, rtol=1e-5)
    assert jnp.allclose(attn_weights, ref_w, atol=1e-5, rtol=1e-5)

    print("KERNEL_OK")
</pallas_src>

<mosaic_0001>
module attributes {stable_mosaic.version = 11 : i64} {
  func.func @fused_mha_kernel(%arg0: i32, %arg1: memref<1x8x32xf32, #tpu.memory_space<vmem>>, %arg2: memref<1x8x32xf32, #tpu.memory_space<vmem>>, %arg3: memref<32x64xf32, #tpu.memory_space<vmem>>, %arg4: memref<1x64xf32, #tpu.memory_space<vmem>>, %arg5: memref<1x8x32xf32, #tpu.memory_space<vmem>>, %arg6: memref<1x8x8xf32, #tpu.memory_space<vmem>>) attributes {dimension_semantics = [#tpu.dimension_semantics<parallel>], iteration_bounds = array<i64: 2>, scalar_prefetch = 0 : i64, scratch_operands = 0 : i64, tpu.core_type = #tpu.core_type<tc>, window_params = [{transform_indices = @transform_0, window_bounds = array<i64: 1, 8, 32>}, {transform_indices = @transform_1, window_bounds = array<i64: 1, 8, 32>}, {pipeline_mode = #tpu.pipeline_mode<synchronous>, transform_indices = @transform_2, window_bounds = array<i64: 32, 64>}, {pipeline_mode = #tpu.pipeline_mode<synchronous>, transform_indices = @transform_3, window_bounds = array<i64: 1, 64>}, {transform_indices = @transform_4, window_bounds = array<i64: 1, 8, 32>}, {transform_indices = @transform_5, window_bounds = array<i64: 1, 8, 8>}]} {
    %c0 = arith.constant 0 : index
    %c0_0 = arith.constant 0 : index
    %c0_1 = arith.constant 0 : index
    %0 = vector.load %arg1[%c0, %c0_0, %c0_1] : memref<1x8x32xf32, #tpu.memory_space<vmem>>, vector<1x8x32xf32>
    %1 = vector.shape_cast %0 : vector<1x8x32xf32> to vector<8x32xf32>
    %cst = arith.constant 0.353553385 : f32
    %2 = vector.broadcast %cst : f32 to vector<8x32xf32>
    %3 = arith.mulf %1, %2 : vector<8x32xf32>
    %c0_2 = arith.constant 0 : index
    %c0_3 = arith.constant 0 : index
    %c0_4 = arith.constant 0 : index
    %4 = vector.load %arg2[%c0_2, %c0_3, %c0_4] : memref<1x8x32xf32, #tpu.memory_space<vmem>>, vector<1x8x32xf32>
    %5 = vector.shape_cast %4 : vector<1x8x32xf32> to vector<8x32xf32>
    %c0_5 = arith.constant 0 : index
    %c0_6 = arith.constant 0 : index
    %6 = vector.load %arg3[%c0_5, %c0_6] : memref<32x64xf32, #tpu.memory_space<vmem>>, vector<32x64xf32>
    %cst_7 = arith.constant dense<0.000000e+00> : vector<8x64xf32>
    %7 = tpu.matmul %5, %6, %cst_7 {dimension_numbers = #tpu.dot_dimension_numbers<[1], [0], [0], [1], [0, 0, 1, 1], [], []>} : vector<8x32xf32>, vector<32x64xf32>, vector<8x64xf32> -> vector<8x64xf32>
    %c0_8 = arith.constant 0 : index
    %c0_9 = arith.constant 0 : index
    %8 = vector.load %arg4[%c0_8, %c0_9] : memref<1x64xf32, #tpu.memory_space<vmem>>, vector<1x64xf32>
    %9 = vector.broadcast %8 : vector<1x64xf32> to vector<8x64xf32>
    %10 = arith.addf %7, %9 : vector<8x64xf32>
    %11 = vector.extract_strided_slice %10 {offsets = [0, 0], sizes = [8, 32], strides = [1, 1]} : vector<8x64xf32> to vector<8x32xf32>
    %12 = vector.extract_strided_slice %10 {offsets = [0, 32], sizes = [8, 32], strides = [1, 1]} : vector<8x64xf32> to vector<8x32xf32>
    %13 = vector.extract_strided_slice %3 {offsets = [0, 0], sizes = [8, 8], strides = [1, 1]} : vector<8x32xf32> to vector<8x8xf32>
    %14 = vector.extract_strided_slice %11 {offsets = [0, 0], sizes = [8, 8], strides = [1, 1]} : vector<8x32xf32> to vector<8x8xf32>
    %15 = vector.extract_strided_slice %12 {offsets = [0, 0], sizes = [8, 8], strides = [1, 1]} : vector<8x32xf32> to vector<8x8xf32>
    %cst_10 = arith.constant dense<0.000000e+00> : vector<8x8xf32>
    %16 = tpu.matmul %13, %14, %cst_10 {dimension_numbers = #tpu.dot_dimension_numbers<[1], [1], [0], [0], [0, 0, 1, 0], [], []>} : vector<8x8xf32>, vector<8x8xf32>, vector<8x8xf32> -> vector<8x8xf32>
    %cst_11 = arith.constant dense<0xFF800000> : vector<8xf32>
    %17 = vector.multi_reduction <maximumf>, %16, %cst_11 [1] : vector<8x8xf32> to vector<8xf32>
    %18 = vector.shape_cast %17 : vector<8xf32> to vector<8x1xf32>
    %19 = vector.broadcast %18 : vector<8x1xf32> to vector<8x8xf32>
    %20 = arith.subf %16, %19 : vector<8x8xf32>
    %21 = math.exp %20 : vector<8x8xf32>
    %cst_12 = arith.constant dense<0.000000e+00> : vector<8xf32>
    %22 = vector.multi_reduction <add>, %21, %cst_12 [1] : vector<8x8xf32> to vector<8xf32>
    %23 = vector.shape_cast %22 : vector<8xf32> to vector<8x1xf32>
    %24 = tpu.reciprocal %23 : vector<8x1xf32> -> vector<8x1xf32>
    %25 = vector.broadcast %24 : vector<8x1xf32> to vector<8x8xf32>
    %26 = arith.mulf %21, %25 : vector<8x8xf32>
    %cst_13 = arith.constant dense<0.000000e+00> : vector<8x8xf32>
    %27 = tpu.matmul %26, %15, %cst_13 {dimension_numbers = #tpu.dot_dimension_numbers<[1], [0], [0], [1], [0, 0, 1, 1], [], []>} : vector<8x8xf32>, vector<8x8xf32>, vector<8x8xf32> -> vector<8x8xf32>
    %28 = vector.extract_strided_slice %3 {offsets = [0, 8], sizes = [8, 8], strides = [1, 1]} : vector<8x32xf32> to vector<8x8xf32>
    %29 = vector.extract_strided_slice %11 {offsets = [0, 8], sizes = [8, 8], strides = [1, 1]} : vector<8x32xf32> to vector<8x8xf32>
    %30 = vector.extract_strided_slice %12 {offsets = [0, 8], sizes = [8, 8], strides = [1, 1]} : vector<8x32xf32> to vector<8x8xf32>
    %cst_14 = arith.constant dense<0.000000e+00> : vector<8x8xf32>
    %31 = tpu.matmul %28, %29, %cst_14 {dimension_numbers = #tpu.dot_dimension_numbers<[1], [1], [0], [0], [0, 0, 1, 0], [], []>} : vector<8x8xf32>, vector<8x8xf32>, vector<8x8xf32> -> vector<8x8xf32>
    %cst_15 = arith.constant dense<0xFF800000> : vector<8xf32>
    %32 = vector.multi_reduction <maximumf>, %31, %cst_15 [1] : vector<8x8xf32> to vector<8xf32>
    %33 = vector.shape_cast %32 : vector<8xf32> to vector<8x1xf32>
    %34 = vector.broadcast %33 : vector<8x1xf32> to vector<8x8xf32>
    %35 = arith.subf %31, %34 : vector<8x8xf32>
    %36 = math.exp %35 : vector<8x8xf32>
    %cst_16 = arith.constant dense<0.000000e+00> : vector<8xf32>
    %37 = vector.multi_reduction <add>, %36, %cst_16 [1] : vector<8x8xf32> to vector<8xf32>
    %38 = vector.shape_cast %37 : vector<8xf32> to vector<8x1xf32>
    %39 = tpu.reciprocal %38 : vector<8x1xf32> -> vector<8x1xf32>
    %40 = vector.broadcast %39 : vector<8x1xf32> to vector<8x8xf32>
    %41 = arith.mulf %36, %40 : vector<8x8xf32>
    %42 = arith.addf %26, %41 : vector<8x8xf32>
    %cst_17 = arith.constant dense<0.000000e+00> : vector<8x8xf32>
    %43 = tpu.matmul %41, %30, %cst_17 {dimension_numbers = #tpu.dot_dimension_numbers<[1], [0], [0], [1], [0, 0, 1, 1], [], []>} : vector<8x8xf32>, vector<8x8xf32>, vector<8x8xf32> -> vector<8x8xf32>
    %44 = vector.extract_strided_slice %3 {offsets = [0, 16], sizes = [8, 8], strides = [1, 1]} : vector<8x32xf32> to vector<8x8xf32>
    %45 = vector.extract_strided_slice %11 {offsets = [0, 16], sizes = [8, 8], strides = [1, 1]} : vector<8x32xf32> to vector<8x8xf32>
    %46 = vector.extract_strided_slice %12 {offsets = [0, 16], sizes = [8, 8], strides = [1, 1]} : vector<8x32xf32> to vector<8x8xf32>
    %cst_18 = arith.constant dense<0.000000e+00> : vector<8x8xf32>
    %47 = tpu.matmul %44, %45, %cst_18 {dimension_numbers = #tpu.dot_dimension_numbers<[1], [1], [0], [0], [0, 0, 1, 0], [], []>} : vector<8x8xf32>, vector<8x8xf32>, vector<8x8xf32> -> vector<8x8xf32>
    %cst_19 = arith.constant dense<0xFF800000> : vector<8xf32>
    %48 = vector.multi_reduction <maximumf>, %47, %cst_19 [1] : vector<8x8xf32> to vector<8xf32>
    %49 = vector.shape_cast %48 : vector<8xf32> to vector<8x1xf32>
    %50 = vector.broadcast %49 : vector<8x1xf32> to vector<8x8xf32>
    %51 = arith.subf %47, %50 : vector<8x8xf32>
    %52 = math.exp %51 : vector<8x8xf32>
    %cst_20 = arith.constant dense<0.000000e+00> : vector<8xf32>
    %53 = vector.multi_reduction <add>, %52, %cst_20 [1] : vector<8x8xf32> to vector<8xf32>
    %54 = vector.shape_cast %53 : vector<8xf32> to vector<8x1xf32>
    %55 = tpu.reciprocal %54 : vector<8x1xf32> -> vector<8x1xf32>
    %56 = vector.broadcast %55 : vector<8x1xf32> to vector<8x8xf32>
    %57 = arith.mulf %52, %56 : vector<8x8xf32>
    %58 = arith.addf %42, %57 : vector<8x8xf32>
    %cst_21 = arith.constant dense<0.000000e+00> : vector<8x8xf32>
    %59 = tpu.matmul %57, %46, %cst_21 {dimension_numbers = #tpu.dot_dimension_numbers<[1], [0], [0], [1], [0, 0, 1, 1], [], []>} : vector<8x8xf32>, vector<8x8xf32>, vector<8x8xf32> -> vector<8x8xf32>
    %60 = vector.extract_strided_slice %3 {offsets = [0, 24], sizes = [8, 8], strides = [1, 1]} : vector<8x32xf32> to vector<8x8xf32>
    %61 = vector.extract_strided_slice %11 {offsets = [0, 24], sizes = [8, 8], strides = [1, 1]} : vector<8x32xf32> to vector<8x8xf32>
    %62 = vector.extract_strided_slice %12 {offsets = [0, 24], sizes = [8, 8], strides = [1, 1]} : vector<8x32xf32> to vector<8x8xf32>
    %cst_22 = arith.constant dense<0.000000e+00> : vector<8x8xf32>
    %63 = tpu.matmul %60, %61, %cst_22 {dimension_numbers = #tpu.dot_dimension_numbers<[1], [1], [0], [0], [0, 0, 1, 0], [], []>} : vector<8x8xf32>, vector<8x8xf32>, vector<8x8xf32> -> vector<8x8xf32>
    %cst_23 = arith.constant dense<0xFF800000> : vector<8xf32>
    %64 = vector.multi_reduction <maximumf>, %63, %cst_23 [1] : vector<8x8xf32> to vector<8xf32>
    %65 = vector.shape_cast %64 : vector<8xf32> to vector<8x1xf32>
    %66 = vector.broadcast %65 : vector<8x1xf32> to vector<8x8xf32>
    %67 = arith.subf %63, %66 : vector<8x8xf32>
    %68 = math.exp %67 : vector<8x8xf32>
    %cst_24 = arith.constant dense<0.000000e+00> : vector<8xf32>
    %69 = vector.multi_reduction <add>, %68, %cst_24 [1] : vector<8x8xf32> to vector<8xf32>
    %70 = vector.shape_cast %69 : vector<8xf32> to vector<8x1xf32>
    %71 = tpu.reciprocal %70 : vector<8x1xf32> -> vector<8x1xf32>
    %72 = vector.broadcast %71 : vector<8x1xf32> to vector<8x8xf32>
    %73 = arith.mulf %68, %72 : vector<8x8xf32>
    %74 = arith.addf %58, %73 : vector<8x8xf32>
    %cst_25 = arith.constant dense<0.000000e+00> : vector<8x8xf32>
    %75 = tpu.matmul %73, %62, %cst_25 {dimension_numbers = #tpu.dot_dimension_numbers<[1], [0], [0], [1], [0, 0, 1, 1], [], []>} : vector<8x8xf32>, vector<8x8xf32>, vector<8x8xf32> -> vector<8x8xf32>
    %76 = tpu.concatenate %27, %43, %59, %75 in 1 : vector<8x8xf32>, vector<8x8xf32>, vector<8x8xf32>, vector<8x8xf32> -> vector<8x32xf32>
    %c0_26 = arith.constant 0 : index
    %c0_27 = arith.constant 0 : index
    %c0_28 = arith.constant 0 : index
    %77 = vector.load %arg5[%c0_26, %c0_27, %c0_28] : memref<1x8x32xf32, #tpu.memory_space<vmem>>, vector<1x8x32xf32>
    %78 = vector.shape_cast %77 : vector<1x8x32xf32> to vector<8x32xf32>
    %79 = vector.shape_cast %76 : vector<8x32xf32> to vector<1x8x32xf32>
    tpu.vector_store %arg5[%c0_26, %c0_27, %c0_28], %79 {strides = array<i32>} : memref<1x8x32xf32, #tpu.memory_space<vmem>>, vector<1x8x32xf32>,
    %cst_29 = arith.constant 2.500000e-01 : f32
    %80 = vector.broadcast %cst_29 : f32 to vector<8x8xf32>
    %81 = arith.mulf %74, %80 : vector<8x8xf32>
    %c0_30 = arith.constant 0 : index
    %c0_31 = arith.constant 0 : index
    %c0_32 = arith.constant 0 : index
    %82 = vector.load %arg6[%c0_30, %c0_31, %c0_32] : memref<1x8x8xf32, #tpu.memory_space<vmem>>, vector<1x8x8xf32>
    %83 = vector.shape_cast %82 : vector<1x8x8xf32> to vector<8x8xf32>
    %84 = vector.shape_cast %81 : vector<8x8xf32> to vector<1x8x8xf32>
    tpu.vector_store %arg6[%c0_30, %c0_31, %c0_32], %84 {strides = array<i32>} : memref<1x8x8xf32, #tpu.memory_space<vmem>>, vector<1x8x8xf32>,
    return
  }
  func.func @transform_0(%arg0: i32) -> (i32, i32, i32) {
    %c0_i32 = arith.constant 0 : i32
    %c0_i32_0 = arith.constant 0 : i32
    %c0_i32_1 = arith.constant 0 : i32
    return %arg0, %c0_i32, %c0_i32_0 : i32, i32, i32
  }
  func.func @transform_1(%arg0: i32) -> (i32, i32, i32) {
    %c0_i32 = arith.constant 0 : i32
    %c0_i32_0 = arith.constant 0 : i32
    %c0_i32_1 = arith.constant 0 : i32
    return %arg0, %c0_i32, %c0_i32_0 : i32, i32, i32
  }
  func.func @transform_2(%arg0: i32) -> (i32, i32) {
    %c0_i32 = arith.constant 0 : i32
    %c0_i32_0 = arith.constant 0 : i32
    %c0_i32_1 = arith.constant 0 : i32
    return %c0_i32, %c0_i32_0 : i32, i32
  }
  func.func @transform_3(%arg0: i32) -> (i32, i32) {
    %c0_i32 = arith.constant 0 : i32
    %c0_i32_0 = arith.constant 0 : i32
    %c0_i32_1 = arith.constant 0 : i32
    return %c0_i32, %c0_i32_0 : i32, i32
  }
  func.func @transform_4(%arg0: i32) -> (i32, i32, i32) {
    %c0_i32 = arith.constant 0 : i32
    %c0_i32_0 = arith.constant 0 : i32
    %c0_i32_1 = arith.constant 0 : i32
    return %arg0, %c0_i32, %c0_i32_0 : i32, i32, i32
  }
  func.func @transform_5(%arg0: i32) -> (i32, i32, i32) {
    %c0_i32 = arith.constant 0 : i32
    %c0_i32_0 = arith.constant 0 : i32
    %c0_i32_1 = arith.constant 0 : i32
    return %arg0, %c0_i32, %c0_i32_0 : i32, i32, i32
  }
}

</mosaic_0001>

<llo_original>
// kernel: tpu_custom_call.1
$region0: #{tpu_custom_call.1}
  #allocation0 [shape = 'u32[]', space=smem, size = 0x4, offset = 0x4, fixed_abs, tag = 'smem constant byte address 0x4 - core index']
  #allocation1 [shape = 'u32[144,128]{1,0:T(1,128)}', space=vmem, size = 0x12000, scoped, tag = 'internal scratch']
  %s0 = inlined_call_operand.hbm [shape: f32[2,8,32], index: 0, kind: input, shape index: {}]
  %s1 = inlined_call_operand.hbm [shape: f32[2,8,32], index: 1, kind: input, shape index: {}]
  %s2 = inlined_call_operand.hbm [shape: f32[32,64], index: 2, kind: input, shape index: {}]
  %s3 = inlined_call_operand.vmem [shape: f32[1,64], index: 3, kind: input, shape index: {}]
  %s4 = inlined_call_operand.hbm [shape: f32[2,8,32], index: 4, kind: output, shape index: {0}]
  %s5 = inlined_call_operand.hbm [shape: f32[2,8,8], index: 5, kind: output, shape index: {1}]
  %6 = xla_tuple %s4, %s5
  %s7 = sld [smem:[#allocation0]]
  $region69: #{tpu_custom_call.1} parent=0
    _
  %s9 = ssub.s32 1, %s7
  %s10 = scalar_select 0, %s9, %s7
  $region1: #{tpu_custom_call.1} parent=0
    #allocation2 [shape = 'u8[8192]{0}', space=vmem, size = 0x2000, scoped, tag = 'input window, operand 0']
    #allocation3 [shape = 's32[2]{0}', space=sflag, size = 0x8, scoped, tag = 'scoped memory for tpu_custom_call.1']
    #allocation4 [shape = 's32[2]{0}', space=sflag, size = 0x8, scoped, tag = 'scoped memory for tpu_custom_call.1']
    #allocation5 [shape = 'u8[8192]{0}', space=vmem, size = 0x2000, scoped, tag = 'input window, operand 1']
    #allocation6 [shape = 's32[2]{0}', space=sflag, size = 0x8, scoped, tag = 'scoped memory for tpu_custom_call.1']
    #allocation7 [shape = 'u8[16384]{0}', space=vmem, size = 0x4000, scoped, tag = 'input window, operand 2, single buffered']
    #allocation8 [shape = 'u8[8192]{0}', space=vmem, size = 0x2000, scoped, tag = 'output window, operand 0']
    #allocation9 [shape = 'u8[8192]{0}', space=vmem, size = 0x2000, scoped, tag = 'output window, operand 1']
    #allocation10 [shape = 's32[2]{0}', space=sflag, size = 0x8, scoped, tag = 'scoped memory for tpu_custom_call.1']
    %11 = vsyncpa [#allocation3], 0
    %s12 = scalar_lea.sflag [#allocation3], 1
    %13 = vsyncpa %s12, 0
    %14 = vsyncpa [#allocation6], 0
    %s15 = scalar_lea.sflag [#allocation6], 1
    %16 = vsyncpa %s15, 0
    %17 = vsyncpa [#allocation4], 0
    %s18 = scalar_lea.sflag [#allocation4], 1
    %19 = vsyncpa %s18, 0
    %20 = vsyncpa [#allocation10], 0
    %s21 = scalar_lea.sflag [#allocation10], 1
    %22 = vsyncpa %s21, 0
    loop: start=0, step=1, limit=4
    $region2: #{tpu_custom_call.1} parent=1 // loop_pre_header
      _
    $region3: #{tpu_custom_call.1} parent=1 // loop_header
      %s24 = sphi 0, %s28
      %p25 = scmp.ge.s32.totalorder %s24, 4
      %s34 = sphi 0, %s36
      %s37 = sphi 0, %s34
      %s38 = sphi 0, %s37
      %s54 = sphi 0, %s38
      %s60 = sphi 0, %s62
      %s63 = sphi 0, %s60
      %s64 = sphi 0, %s63
      %s80 = sphi 0, %s64
      %s84 = sphi 0, %s84
      %s86 = sphi 0, %s84
      %s87 = sphi 0, %s86
      %s101 = sphi 0, %s87
      %s105 = sphi 0, %s105
      %s107 = sphi 0, %s105
      %s108 = sphi 0, %s107
      %s122 = sphi 0, %s108
      %s128 = sphi 0, %s130
      %s131 = sphi 0, %s128
      %s132 = sphi 0, %s131
      %s148 = sphi 0, %s132
      %s154 = sphi 0, %s156
      %s157 = sphi 0, %s154
      %s158 = sphi 0, %s157
      %s174 = sphi 0, %s158
    $region4: #{tpu_custom_call.1} parent=1 // loop_header_branch
      %27 = sbr.rel (%p25) target = $region8
    $region5: #{tpu_custom_call.1} parent=1 // loop_body
      %s29 = ssub.s32 %s24, 1
      %s30 = ssub.s32 %s24, 2
      %s31 = sadd.s32 %s24, 1
      %s32 = ssub.s32 %s24, %s31
      %p33 = scmp.eq.s32.totalorder %s32, 0
      %s35 = sadd.s32 %s34, 1
      %s36 = scalar_select %p33, %s34, %s35
      %p39 = pneg %p33
      %p40 = scmp.eq.s32.totalorder %s24, 1
      %p41 = por %p39, %p40
      %p42 = scmp.ne.s32.totalorder %s34, %s37
      %p43 = scmp.eq.s32.totalorder %s24, 0
      %p44 = por %p42, %p43
      %p45 = scmp.ne.s32.totalorder %s34, %s37
      %p46 = scmp.eq.s32.totalorder %s29, 1
      %p47 = por %p45, %p46
      %p48 = scmp.ne.s32.totalorder %s37, %s38
      %p49 = scmp.eq.s32.totalorder %s29, 0
      %p50 = por %p48, %p49
      %p51 = scmp.ne.s32.totalorder %s37, %s38
      %p52 = scmp.eq.s32.totalorder %s30, 1
      %p53 = por %p51, %p52
      %p55 = scmp.ne.s32.totalorder %s38, %s54
      %p56 = scmp.eq.s32.totalorder %s30, 0
      %p57 = por %p55, %p56
      %s58 = ssub.s32 %s24, %s31
      %p59 = scmp.eq.s32.totalorder %s58, 0
      %s61 = sadd.s32 %s60, 1
      %s62 = scalar_select %p59, %s60, %s61
      %p65 = pneg %p59
      %p66 = scmp.eq.s32.totalorder %s24, 1
      %p67 = por %p65, %p66
      %p68 = scmp.ne.s32.totalorder %s60, %s63
      %p69 = scmp.eq.s32.totalorder %s24, 0
      %p70 = por %p68, %p69
      %p71 = scmp.ne.s32.totalorder %s60, %s63
      %p72 = scmp.eq.s32.totalorder %s29, 1
      %p73 = por %p71, %p72
      %p74 = scmp.ne.s32.totalorder %s63, %s64
      %p75 = scmp.eq.s32.totalorder %s29, 0
      %p76 = por %p74, %p75
      %p77 = scmp.ne.s32.totalorder %s63, %s64
      %p78 = scmp.eq.s32.totalorder %s30, 1
      %p79 = por %p77, %p78
      %p81 = scmp.ne.s32.totalorder %s64, %s80
      %p82 = scmp.eq.s32.totalorder %s30, 0
      %p83 = por %p81, %p82
      %s85 = sadd.s32 %s84, 1
      %p88 = scmp.eq.s32.totalorder %s24, 1
      %p89 = scmp.ne.s32.totalorder %s84, %s86
      %p90 = scmp.eq.s32.totalorder %s24, 0
      %p91 = por %p89, %p90
      %p92 = scmp.ne.s32.totalorder %s84, %s86
      %p93 = scmp.eq.s32.totalorder %s29, 1
      %p94 = por %p92, %p93
      %p95 = scmp.ne.s32.totalorder %s86, %s87
      %p96 = scmp.eq.s32.totalorder %s29, 0
      %p97 = por %p95, %p96
      %p98 = scmp.ne.s32.totalorder %s86, %s87
      %p99 = scmp.eq.s32.totalorder %s30, 1
      %p100 = por %p98, %p99
      %p102 = scmp.ne.s32.totalorder %s87, %s101
      %p103 = scmp.eq.s32.totalorder %s30, 0
      %p104 = por %p102, %p103
      %s106 = sadd.s32 %s105, 1
      %p109 = scmp.eq.s32.totalorder %s24, 1
      %p110 = scmp.ne.s32.totalorder %s105, %s107
      %p111 = scmp.eq.s32.totalorder %s24, 0
      %p112 = por %p110, %p111
      %p113 = scmp.ne.s32.totalorder %s105, %s107
      %p114 = scmp.eq.s32.totalorder %s29, 1
      %p115 = por %p113, %p114
      %p116 = scmp.ne.s32.totalorder %s107, %s108
      %p117 = scmp.eq.s32.totalorder %s29, 0
      %p118 = por %p116, %p117
      %p119 = scmp.ne.s32.totalorder %s107, %s108
      %p120 = scmp.eq.s32.totalorder %s30, 1
      %p121 = por %p119, %p120
      %p123 = scmp.ne.s32.totalorder %s108, %s122
      %p124 = scmp.eq.s32.totalorder %s30, 0
      %p125 = por %p123, %p124
      %s126 = ssub.s32 %s24, %s31
      %p127 = scmp.eq.s32.totalorder %s126, 0
      %s129 = sadd.s32 %s128, 1
      %s130 = scalar_select %p127, %s128, %s129
      %p133 = pneg %p127
      %p134 = scmp.eq.s32.totalorder %s24, 1
      %p135 = por %p133, %p134
      %p136 = scmp.ne.s32.totalorder %s128, %s131
      %p137 = scmp.eq.s32.totalorder %s24, 0
      %p138 = por %p136, %p137
      %p139 = scmp.ne.s32.totalorder %s128, %s131
      %p140 = scmp.eq.s32.totalorder %s29, 1
      %p141 = por %p139, %p140
      %p142 = scmp.ne.s32.totalorder %s131, %s132
      %p143 = scmp.eq.s32.totalorder %s29, 0
      %p144 = por %p142, %p143
      %p145 = scmp.ne.s32.totalorder %s131, %s132
      %p146 = scmp.eq.s32.totalorder %s30, 1
      %p147 = por %p145, %p146
      %p149 = scmp.ne.s32.totalorder %s132, %s148
      %p150 = scmp.eq.s32.totalorder %s30, 0
      %p151 = por %p149, %p150
      %s152 = ssub.s32 %s24, %s31
      %p153 = scmp.eq.s32.totalorder %s152, 0
      %s155 = sadd.s32 %s154, 1
      %s156 = scalar_select %p153, %s154, %s155
      %p159 = pneg %p153
      %p160 = scmp.eq.s32.totalorder %s24, 1
      %p161 = por %p159, %p160
      %p162 = scmp.ne.s32.totalorder %s154, %s157
      %p163 = scmp.eq.s32.totalorder %s24, 0
      %p164 = por %p162, %p163
      %p165 = scmp.ne.s32.totalorder %s154, %s157
      %p166 = scmp.eq.s32.totalorder %s29, 1
      %p167 = por %p165, %p166
      %p168 = scmp.ne.s32.totalorder %s157, %s158
      %p169 = scmp.eq.s32.totalorder %s29, 0
      %p170 = por %p168, %p169
      %p171 = scmp.ne.s32.totalorder %s157, %s158
      %p172 = scmp.eq.s32.totalorder %s30, 1
      %p173 = por %p171, %p172
      %p175 = scmp.ne.s32.totalorder %s158, %s174
      %p176 = scmp.eq.s32.totalorder %s30, 0
      %p177 = por %p175, %p176
      %p178 = scmp.le.s32.totalorder 1, %s24
      %p179 = scmp.lt.s32.totalorder %s24, 3
      %p180 = pnand %p178, %p179
      %p181 = pneg %p180
      // Predicated region
      $region9: #{tpu_custom_call.1} parent=5 // pred_check
        _
      $region10: #{tpu_custom_call.1} parent=5 // pred_check_branch
        %183 = sbr.rel (%p180) target = $region12
      $region11: #{tpu_custom_call.1} parent=5 // pred_region
        %s184 = ssub.s32 %s24, 1
        // Predicated region
        $region13: #{tpu_custom_call.1} parent=11 // pred_check
          %p185 = pneg %p97
        $region14: #{tpu_custom_call.1} parent=11 // pred_check_branch
          %187 = sbr.rel (%p185) target = $region16
        $region15: #{tpu_custom_call.1} parent=11 // pred_region
          %s189 = ssub.s32 512, 512
          %190 = vsyncadd [#allocation6], %s189
          %s191 = sshll.u32 [#allocation7], 4
          %s192 = int_to_ptr.vmem [resolvable:$true] %s191
          %197 = dma.hbm_to_vmem [thread:$0]  %s2, 512, %s192, [#allocation6], 128, 128, 8
        $region16: #{tpu_custom_call.1} parent=11 // pred_fallthru
          _
        // Predicated region
        $region17: #{tpu_custom_call.1} parent=11 // pred_check
          %p198 = pneg %p118
        $region18: #{tpu_custom_call.1} parent=11 // pred_check_branch
          %200 = sbr.rel (%p198) target = $region20
        $region19: #{tpu_custom_call.1} parent=11 // pred_region
          _
        $region20: #{tpu_custom_call.1} parent=11 // pred_fallthru
          _
      $region12: #{tpu_custom_call.1} parent=5 // pred_fallthru
        _
      %p201 = scmp.lt.s32.totalorder %s24, 2
      // Predicated region
      $region21: #{tpu_custom_call.1} parent=5 // pred_check
        %p202 = pneg %p201
      $region22: #{tpu_custom_call.1} parent=5 // pred_check_branch
        %204 = sbr.rel (%p202) target = $region24
      $region23: #{tpu_custom_call.1} parent=5 // pred_region
        // Predicated region
        $region25: #{tpu_custom_call.1} parent=23 // pred_check
          %p205 = pneg %p44
        $region26: #{tpu_custom_call.1} parent=23 // pred_check_branch
          %207 = sbr.rel (%p205) target = $region28
        $region27: #{tpu_custom_call.1} parent=23 // pred_region
          %s208 = sand.u32 %s34, 1
          %s209 = scalar_lea.sflag [#allocation3], %s208
          %s210 = sand.u32 %s34, 1
          %s211 = smul.addr %s210, 8
          %s212 = scalar_lea.vmem [#allocation2], %s211
          %s214 = ssub.s32 128, 128
          %215 = vsyncadd %s209, %s214
          %s216 = smul.addr %s24, 128
          %s217 = scalar_lea.hbm %s0, %s216
          %s219 = sshll.u32 %s212, 4
          %s220 = int_to_ptr.vmem [resolvable:$true] %s219
          %222 = dma.hbm_to_vmem [thread:$0]  %s217, 128, %s220, %s209
        $region28: #{tpu_custom_call.1} parent=23 // pred_fallthru
          _
        // Predicated region
        $region29: #{tpu_custom_call.1} parent=23 // pred_check
          %p223 = pneg %p70
        $region30: #{tpu_custom_call.1} parent=23 // pred_check_branch
          %225 = sbr.rel (%p223) target = $region32
        $region31: #{tpu_custom_call.1} parent=23 // pred_region
          %s226 = sand.u32 %s24, 1
          %s227 = scalar_lea.sflag [#allocation6], %s226
          %s228 = sand.u32 %s60, 1
          %s229 = smul.addr %s228, 8
          %s230 = scalar_lea.vmem [#allocation5], %s229
          %s232 = ssub.s32 128, 128
          %233 = vsyncadd %s227, %s232
          %s234 = smul.addr %s24, 128
          %s235 = scalar_lea.hbm %s1, %s234
          %s237 = sshll.u32 %s230, 4
          %s238 = int_to_ptr.vmem [resolvable:$true] %s237
          %240 = dma.hbm_to_vmem [thread:$0]  %s235, 128, %s238, %s227
        $region32: #{tpu_custom_call.1} parent=23 // pred_fallthru
          _
      $region24: #{tpu_custom_call.1} parent=5 // pred_fallthru
        _
      %p241 = scmp.le.s32.totalorder 1, %s24
      %p242 = scmp.lt.s32.totalorder %s24, 3
      %p243 = pnand %p241, %p242
      %p244 = pneg %p243
      // Predicated region
      $region33: #{tpu_custom_call.1} parent=5 // pred_check
        _
      $region34: #{tpu_custom_call.1} parent=5 // pred_check_branch
        %246 = sbr.rel (%p243) target = $region36
      $region35: #{tpu_custom_call.1} parent=5 // pred_region
        %s247 = ssub.s32 %s24, 1
        %s248 = sand.u32 %s37, 1
        %s249 = scalar_lea.sflag [#allocation3], %s248
        %s250 = sand.u32 %s37, 1
        %s251 = smul.addr %s250, 8
        %s252 = scalar_lea.vmem [#allocation2], %s251
        // Predicated region
        $region37: #{tpu_custom_call.1} parent=35 // pred_check
          %p253 = pneg %p50
        $region38: #{tpu_custom_call.1} parent=35 // pred_check_branch
          %255 = sbr.rel (%p253) target = $region40
        $region39: #{tpu_custom_call.1} parent=35 // pred_region
          %256 = dma.done %s249, 128
        $region40: #{tpu_custom_call.1} parent=35 // pred_fallthru
          _
        %s257 = sand.u32 %s29, 1
        %s258 = scalar_lea.sflag [#allocation6], %s257
        %s259 = sand.u32 %s63, 1
        %s260 = smul.addr %s259, 8
        %s261 = scalar_lea.vmem [#allocation5], %s260
        // Predicated region
        $region41: #{tpu_custom_call.1} parent=35 // pred_check
          %p262 = pneg %p76
        $region42: #{tpu_custom_call.1} parent=35 // pred_check_branch
          %264 = sbr.rel (%p262) target = $region44
        $region43: #{tpu_custom_call.1} parent=35 // pred_region
          %265 = dma.done %s258, 128
        $region44: #{tpu_custom_call.1} parent=35 // pred_fallthru
          _
        // Predicated region
        $region45: #{tpu_custom_call.1} parent=35 // pred_check
          %p266 = pneg %p97
        $region46: #{tpu_custom_call.1} parent=35 // pred_check_branch
          %268 = sbr.rel (%p266) target = $region48
        $region47: #{tpu_custom_call.1} parent=35 // pred_region
          %269 = dma.done [#allocation6], 512
        $region48: #{tpu_custom_call.1} parent=35 // pred_fallthru
          _
        %s270 = sand.u32 %s37, 1
        %s271 = scalar_lea.sflag [#allocation3], %s270
        %s272 = sand.u32 %s37, 1
        %s273 = smul.addr %s272, 8
        %s274 = scalar_lea.vmem [#allocation2], %s273
        %p275 = pneg %p50
        %p276 = pneg %p47
        %s277 = sand.u32 %s29, 1
        %s278 = scalar_lea.sflag [#allocation6], %s277
        %s279 = sand.u32 %s63, 1
        %s280 = smul.addr %s279, 8
        %s281 = scalar_lea.vmem [#allocation5], %s280
        %p282 = pneg %p76
        %p283 = pneg %p73
        %p284 = pneg %p97
        %p285 = pneg %p94
        %p286 = pneg %p118
        %p287 = pneg %p115
        %p288 = pneg %p144
        %p289 = pneg %p141
        %s290 = sand.u32 %s131, 1
        %s291 = scalar_lea.sflag [#allocation4], %s290
        %s292 = sand.u32 %s131, 1
        %s293 = smul.addr %s292, 8
        %s294 = scalar_lea.vmem [#allocation8], %s293
        %p295 = pneg %p170
        %p296 = pneg %p167
        %s297 = sand.u32 %s157, 1
        %s298 = scalar_lea.sflag [#allocation10], %s297
        %s299 = sand.u32 %s157, 1
        %s300 = smul.addr %s299, 8
        %s301 = scalar_lea.vmem [#allocation9], %s300
        %v302 = vld [vmem:[%s252] sm:$0xff]
        %v303 = vmul.f32 %v302, 0.35355338
        %v304 = vld [vmem:[%s261] sm:$0xff]
        %v305 = vld [vmem:[#allocation7] sm:$0xff]
        %v306 = vld [vmem:[#allocation7 + $0x8] sm:$0xff]
        %v307 = vld [vmem:[#allocation7 + $0x10] sm:$0xff]
        %v308 = vld [vmem:[#allocation7 + $0x18] sm:$0xff]
        %v309 = vld [vmem:[%s3] sm:$0x1]
        %v311 = vlaneseq
        %v312 = vshrl.u32 %v311, 7
        %v313 = vsub.s32 0, %v312
        %v314 = vrot.slane %v309, %v313
        %vm316 = vcmask 261120
        %v318 = vsel %vm316, %v304, 0
        %320 = vmatprep.subr.mxu0 0.0
        %321 = vmatpush1.msra.mxu0 %v305
        %322 = vmatprep.subr.mxu0 0.0
        %323 = vmatpush1.msra.mxu0 %v306
        %324 = vmatprep.subr.mxu0 0.0
        %325 = vmatpush1.msra.mxu0 %v307
        %326 = vmatprep.subr.mxu0 0.0
        %327 = vmatpush1.msra.mxu0 %v308
        %328 = vmatprep.subr.mxu0 0.0
        %329 = vmatpush1.msra.mxu0 0.0
        %330 = vmatprep.subr.mxu0 0.0
        %331 = vmatpush1.msra.mxu0 0.0
        %332 = vmatprep.subr.mxu0 0.0
        %333 = vmatpush1.msra.mxu0 0.0
        %334 = vmatprep.subr.mxu0 0.0
        %335 = vmatpush1.msra.mxu0 0.0
        %336 = vmatprep.subr.mxu0 0.0
        %337 = vmatpush1.msra.mxu0 0.0
        %338 = vmatprep.subr.mxu0 0.0
        %339 = vmatpush1.msra.mxu0 0.0
        %340 = vmatprep.subr.mxu0 0.0
        %341 = vmatpush1.msra.mxu0 0.0
        %342 = vmatprep.subr.mxu0 0.0
        %343 = vmatpush1.msra.mxu0 0.0
        %344 = vmatprep.subr.mxu0 0.0
        %345 = vmatpush1.msra.mxu0 0.0
        %346 = vmatprep.subr.mxu0 0.0
        %347 = vmatpush1.msra.mxu0 0.0
        %348 = vmatprep.subr.mxu0 0.0
        %349 = vmatpush1.msra.mxu0 0.0
        %350 = vmatprep.subr.mxu0 0.0
        %351 = vmatpush1.msra.mxu0 0.0
        %352 = vmatprep.subr.mxu0 0.0
        %353 = vmatpush1.msra.mxu0 0.0
        %354 = vmatprep.subr.mxu0 0.0
        %355 = vmatpush1.msra.mxu0 0.0
        %356 = vmatprep.subr.mxu0 0.0
        %357 = vmatpush1.msra.mxu0 0.0
        %358 = vmatprep.subr.mxu0 0.0
        %359 = vmatpush1.msra.mxu0 0.0
        %360 = vmatprep.subr.mxu0 0.0
        %361 = vmatpush1.msra.mxu0 0.0
        %362 = vmatprep.subr.mxu0 0.0
        %363 = vmatpush1.msra.mxu0 0.0
        %364 = vmatprep.subr.mxu0 0.0
        %365 = vmatpush1.msra.mxu0 0.0
        %366 = vmatprep.subr.mxu0 0.0
        %367 = vmatpush1.msra.mxu0 0.0
        %368 = vmatprep.subr.mxu0 0.0
        %369 = vmatpush1.msra.mxu0 0.0
        %370 = vmatprep.subr.mxu0 0.0
        %371 = vmatpush1.msra.mxu0 0.0
        %372 = vmatprep.subr.mxu0 0.0
        %373 = vmatpush1.msra.mxu0 0.0
        %374 = vmatprep.subr.mxu0 0.0
        %375 = vmatpush1.msra.mxu0 0.0
        %376 = vmatprep.subr.mxu0 0.0
        %377 = vmatpush1.msra.mxu0 0.0
        %378 = vmatprep.subr.mxu0 0.0
        %379 = vmatpush1.msra.mxu0 0.0
        %380 = vmatprep.subr.mxu0 0.0
        %381 = vmatpush1.msra.mxu0 0.0
        %382 = vmatprep.subr.mxu0 0.0
        %383 = vmatpush1.msra.mxu0 0.0
        %384 = vmatprep.mubr.f32.mxu0 0.0
        %385 = vmatmul.mubr.f32.gmra.mrb[0].mxu0 %v318
        %v386 = vpop.f32.mrb[0].mxu0
        %v387 = vadd.f32 %v314, %v386
        %v388 = vpop.f32.mrb[0].mxu0
        %389 = vdwg.mxu0
        %vm390 = vcmask 64512
        %v392 = vsel %vm390, %v303, 0
        %v395 = vsel %vm390, %v387, 0
        %397 = vmatprep.subr.mxu0 0.0
        %398 = vmatpush1.xpose.msra.mxu0 %v395
        %399 = vmatprep.subr.mxu0 0.0
        %400 = vmatpush1.xpose.msra.mxu0 0.0
        %401 = vmatprep.subr.mxu0 0.0
        %402 = vmatpush1.xpose.msra.mxu0 0.0
        %403 = vmatprep.subr.mxu0 0.0
        %404 = vmatpush1.xpose.msra.mxu0 0.0
        %405 = vmatprep.subr.mxu0 0.0
        %406 = vmatpush1.xpose.msra.mxu0 0.0
        %407 = vmatprep.subr.mxu0 0.0
        %408 = vmatpush1.xpose.msra.mxu0 0.0
        %409 = vmatprep.subr.mxu0 0.0
        %410 = vmatpush1.xpose.msra.mxu0 0.0
        %411 = vmatprep.subr.mxu0 0.0
        %412 = vmatpush1.xpose.msra.mxu0 0.0
        %413 = vmatprep.subr.mxu0 0.0
        %414 = vmatpush1.xpose.msra.mxu0 0.0
        %415 = vmatprep.subr.mxu0 0.0
        %416 = vmatpush1.xpose.msra.mxu0 0.0
        %417 = vmatprep.subr.mxu0 0.0
        %418 = vmatpush1.xpose.msra.mxu0 0.0
        %419 = vmatprep.subr.mxu0 0.0
        %420 = vmatpush1.xpose.msra.mxu0 0.0
        %421 = vmatprep.subr.mxu0 0.0
        %422 = vmatpush1.xpose.msra.mxu0 0.0
        %423 = vmatprep.subr.mxu0 0.0
        %424 = vmatpush1.xpose.msra.mxu0 0.0
        %425 = vmatprep.subr.mxu0 0.0
        %426 = vmatpush1.xpose.msra.mxu0 0.0
        %427 = vmatprep.subr.mxu0 0.0
        %428 = vmatpush1.xpose.msra.mxu0 0.0
        %429 = vmatprep.subr.mxu0 0.0
        %430 = vmatpush1.xpose.msra.mxu0 0.0
        %431 = vmatprep.subr.mxu0 0.0
        %432 = vmatpush1.xpose.msra.mxu0 0.0
        %433 = vmatprep.subr.mxu0 0.0
        %434 = vmatpush1.xpose.msra.mxu0 0.0
        %435 = vmatprep.subr.mxu0 0.0
        %436 = vmatpush1.xpose.msra.mxu0 0.0
        %437 = vmatprep.subr.mxu0 0.0
        %438 = vmatpush1.xpose.msra.mxu0 0.0
        %439 = vmatprep.subr.mxu0 0.0
        %440 = vmatpush1.xpose.msra.mxu0 0.0
        %441 = vmatprep.subr.mxu0 0.0
        %442 = vmatpush1.xpose.msra.mxu0 0.0
        %443 = vmatprep.subr.mxu0 0.0
        %444 = vmatpush1.xpose.msra.mxu0 0.0
        %445 = vmatprep.subr.mxu0 0.0
        %446 = vmatpush1.xpose.msra.mxu0 0.0
        %447 = vmatprep.subr.mxu0 0.0
        %448 = vmatpush1.xpose.msra.mxu0 0.0
        %449 = vmatprep.subr.mxu0 0.0
        %450 = vmatpush1.xpose.msra.mxu0 0.0
        %451 = vmatprep.subr.mxu0 0.0
        %452 = vmatpush1.xpose.msra.mxu0 0.0
        %453 = vmatprep.subr.mxu0 0.0
        %454 = vmatpush1.xpose.msra.mxu0 0.0
        %455 = vmatprep.subr.mxu0 0.0
        %456 = vmatpush1.xpose.msra.mxu0 0.0
        %457 = vmatprep.subr.mxu0 0.0
        %458 = vmatpush1.xpose.msra.mxu0 0.0
        %459 = vmatprep.subr.mxu0 0.0
        %460 = vmatpush1.xpose.msra.mxu0 0.0
        %461 = vmatprep.mubr.f32.mxu0 0.0
        %462 = vmatmul.mubr.f32.gmra.mrb[0].mxu0 %v392
        %v463 = vpop.f32.mrb[0].mxu0
        %v464 = vadd.f32 0.0, %v463
        %v465 = vpop.f32.mrb[0].mxu0
        %466 = vdwg.mxu0
        %v467 = vsel %vm390, %v464, -inf
        %468 = vmax.xlane.f32.xlu0 %v467
        %v469 = vpop.xlane.xlu0 %468
        %v470 = vsub.f32 %v464, %v469
        %v471 = vmul.f32 %v470, 1.442695
        %v472 = vpow.pop %v471
        %v473 = vsel %vm390, %v472, 0.0
        %474 = vadd.xlane.f32.xlu0 %v473
        %v475 = vpop.xlane.xlu0 %474
        %v476 = vrcp.pop %v475
        %v477 = vmul.f32 %v472, %v476
        %478 = vrot.lane.b32.xlu0 %v387, 96
        %v479 = vpop.permute.xlu0 %478
        %v482 = vsel %vm390, %v477, 0
        %484 = vmatprep.subr.mxu0 0.0
        %485 = vmatpush1.msra.mxu0 %v479
        %486 = vmatprep.subr.mxu0 0.0
        %487 = vmatpush1.msra.mxu0 0.0
        %488 = vmatprep.subr.mxu0 0.0
        %489 = vmatpush1.msra.mxu0 0.0
        %490 = vmatprep.subr.mxu0 0.0
        %491 = vmatpush1.msra.mxu0 0.0
        %492 = vmatprep.subr.mxu0 0.0
        %493 = vmatpush1.msra.mxu0 0.0
        %494 = vmatprep.subr.mxu0 0.0
        %495 = vmatpush1.msra.mxu0 0.0
        %496 = vmatprep.subr.mxu0 0.0
        %497 = vmatpush1.msra.mxu0 0.0
        %498 = vmatprep.subr.mxu0 0.0
        %499 = vmatpush1.msra.mxu0 0.0
        %500 = vmatprep.subr.mxu0 0.0
        %501 = vmatpush1.msra.mxu0 0.0
        %502 = vmatprep.subr.mxu0 0.0
        %503 = vmatpush1.msra.mxu0 0.0
        %504 = vmatprep.subr.mxu0 0.0
        %505 = vmatpush1.msra.mxu0 0.0
        %506 = vmatprep.subr.mxu0 0.0
        %507 = vmatpush1.msra.mxu0 0.0
        %508 = vmatprep.subr.mxu0 0.0
        %509 = vmatpush1.msra.mxu0 0.0
        %510 = vmatprep.subr.mxu0 0.0
        %511 = vmatpush1.msra.mxu0 0.0
        %512 = vmatprep.subr.mxu0 0.0
        %513 = vmatpush1.msra.mxu0 0.0
        %514 = vmatprep.subr.mxu0 0.0
        %515 = vmatpush1.msra.mxu0 0.0
        %516 = vmatprep.subr.mxu0 0.0
        %517 = vmatpush1.msra.mxu0 0.0
        %518 = vmatprep.subr.mxu0 0.0
        %519 = vmatpush1.msra.mxu0 0.0
        %520 = vmatprep.subr.mxu0 0.0
        %521 = vmatpush1.msra.mxu0 0.0
        %522 = vmatprep.subr.mxu0 0.0
        %523 = vmatpush1.msra.mxu0 0.0
        %524 = vmatprep.subr.mxu0 0.0
        %525 = vmatpush1.msra.mxu0 0.0
        %526 = vmatprep.subr.mxu0 0.0
        %527 = vmatpush1.msra.mxu0 0.0
        %528 = vmatprep.subr.mxu0 0.0
        %529 = vmatpush1.msra.mxu0 0.0
        %530 = vmatprep.subr.mxu0 0.0
        %531 = vmatpush1.msra.mxu0 0.0
        %532 = vmatprep.subr.mxu0 0.0
        %533 = vmatpush1.msra.mxu0 0.0
        %534 = vmatprep.subr.mxu0 0.0
        %535 = vmatpush1.msra.mxu0 0.0
        %536 = vmatprep.subr.mxu0 0.0
        %537 = vmatpush1.msra.mxu0 0.0
        %538 = vmatprep.subr.mxu0 0.0
        %539 = vmatpush1.msra.mxu0 0.0
        %540 = vmatprep.subr.mxu0 0.0
        %541 = vmatpush1.msra.mxu0 0.0
        %542 = vmatprep.subr.mxu0 0.0
        %543 = vmatpush1.msra.mxu0 0.0
        %544 = vmatprep.subr.mxu0 0.0
        %545 = vmatpush1.msra.mxu0 0.0
        %546 = vmatprep.subr.mxu0 0.0
        %547 = vmatpush1.msra.mxu0 0.0
        %548 = vmatprep.mubr.f32.mxu0 0.0
        %549 = vmatmul.mubr.f32.gmra.mrb[0].mxu0 %v482
        %v550 = vpop.f32.mrb[0].mxu0
        %v551 = vadd.f32 0.0, %v550
        %v552 = vpop.f32.mrb[0].mxu0
        %553 = vdwg.mxu0
        %554 = vrot.lane.b32.xlu0 %v303, 120
        %v555 = vpop.permute.xlu0 %554
        %556 = vrot.lane.b32.xlu0 %v387, 120
        %v557 = vpop.permute.xlu0 %556
        %v558 = vsel %vm390, %v555, 0
        %v560 = vsel %vm390, %v557, 0
        %562 = vmatprep.subr.mxu0 0.0
        %563 = vmatpush1.xpose.msra.mxu0 %v560
        %564 = vmatprep.subr.mxu0 0.0
        %565 = vmatpush1.xpose.msra.mxu0 0.0
        %566 = vmatprep.subr.mxu0 0.0
        %567 = vmatpush1.xpose.msra.mxu0 0.0
        %568 = vmatprep.subr.mxu0 0.0
        %569 = vmatpush1.xpose.msra.mxu0 0.0
        %570 = vmatprep.subr.mxu0 0.0
        %571 = vmatpush1.xpose.msra.mxu0 0.0
        %572 = vmatprep.subr.mxu0 0.0
        %573 = vmatpush1.xpose.msra.mxu0 0.0
        %574 = vmatprep.subr.mxu0 0.0
        %575 = vmatpush1.xpose.msra.mxu0 0.0
        %576 = vmatprep.subr.mxu0 0.0
        %577 = vmatpush1.xpose.msra.mxu0 0.0
        %578 = vmatprep.subr.mxu0 0.0
        %579 = vmatpush1.xpose.msra.mxu0 0.0
        %580 = vmatprep.subr.mxu0 0.0
        %581 = vmatpush1.xpose.msra.mxu0 0.0
        %582 = vmatprep.subr.mxu0 0.0
        %583 = vmatpush1.xpose.msra.mxu0 0.0
        %584 = vmatprep.subr.mxu0 0.0
        %585 = vmatpush1.xpose.msra.mxu0 0.0
        %586 = vmatprep.subr.mxu0 0.0
        %587 = vmatpush1.xpose.msra.mxu0 0.0
        %588 = vmatprep.subr.mxu0 0.0
        %589 = vmatpush1.xpose.msra.mxu0 0.0
        %590 = vmatprep.subr.mxu0 0.0
        %591 = vmatpush1.xpose.msra.mxu0 0.0
        %592 = vmatprep.subr.mxu0 0.0
        %593 = vmatpush1.xpose.msra.mxu0 0.0
        %594 = vmatprep.subr.mxu0 0.0
        %595 = vmatpush1.xpose.msra.mxu0 0.0
        %596 = vmatprep.subr.mxu0 0.0
        %597 = vmatpush1.xpose.msra.mxu0 0.0
        %598 = vmatprep.subr.mxu0 0.0
        %599 = vmatpush1.xpose.msra.mxu0 0.0
        %600 = vmatprep.subr.mxu0 0.0
        %601 = vmatpush1.xpose.msra.mxu0 0.0
        %602 = vmatprep.subr.mxu0 0.0
        %603 = vmatpush1.xpose.msra.mxu0 0.0
        %604 = vmatprep.subr.mxu0 0.0
        %605 = vmatpush1.xpose.msra.mxu0 0.0
        %606 = vmatprep.subr.mxu0 0.0
        %607 = vmatpush1.xpose.msra.mxu0 0.0
        %608 = vmatprep.subr.mxu0 0.0
        %609 = vmatpush1.xpose.msra.mxu0 0.0
        %610 = vmatprep.subr.mxu0 0.0
        %611 = vmatpush1.xpose.msra.mxu0 0.0
        %612 = vmatprep.subr.mxu0 0.0
        %613 = vmatpush1.xpose.msra.mxu0 0.0
        %614 = vmatprep.subr.mxu0 0.0
        %615 = vmatpush1.xpose.msra.mxu0 0.0
        %616 = vmatprep.subr.mxu0 0.0
        %617 = vmatpush1.xpose.msra.mxu0 0.0
        %618 = vmatprep.subr.mxu0 0.0
        %619 = vmatpush1.xpose.msra.mxu0 0.0
        %620 = vmatprep.subr.mxu0 0.0
        %621 = vmatpush1.xpose.msra.mxu0 0.0
        %622 = vmatprep.subr.mxu0 0.0
        %623 = vmatpush1.xpose.msra.mxu0 0.0
        %624 = vmatprep.subr.mxu0 0.0
        %625 = vmatpush1.xpose.msra.mxu0 0.0
        %626 = vmatprep.mubr.f32.mxu0 0.0
        %627 = vmatmul.mubr.f32.gmra.mrb[0].mxu0 %v558
        %v628 = vpop.f32.mrb[0].mxu0
        %v629 = vadd.f32 0.0, %v628
        %v630 = vpop.f32.mrb[0].mxu0
        %631 = vdwg.mxu0
        %v632 = vsel %vm390, %v629, -inf
        %633 = vmax.xlane.f32.xlu0 %v632
        %v634 = vpop.xlane.xlu0 %633
        %v635 = vsub.f32 %v629, %v634
        %v636 = vmul.f32 %v635, 1.442695
        %v637 = vpow.pop %v636
        %v638 = vsel %vm390, %v637, 0.0
        %639 = vadd.xlane.f32.xlu0 %v638
        %v640 = vpop.xlane.xlu0 %639
        %v641 = vrcp.pop %v640
        %v642 = vmul.f32 %v637, %v641
        %v643 = vadd.f32 %v477, %v642
        %644 = vrot.lane.b32.xlu0 %v387, 88
        %v645 = vpop.permute.xlu0 %644
        %v648 = vsel %vm390, %v642, 0
        %650 = vmatprep.subr.mxu0 0.0
        %651 = vmatpush1.msra.mxu0 %v645
        %652 = vmatprep.subr.mxu0 0.0
        %653 = vmatpush1.msra.mxu0 0.0
        %654 = vmatprep.subr.mxu0 0.0
        %655 = vmatpush1.msra.mxu0 0.0
        %656 = vmatprep.subr.mxu0 0.0
        %657 = vmatpush1.msra.mxu0 0.0
        %658 = vmatprep.subr.mxu0 0.0
        %659 = vmatpush1.msra.mxu0 0.0
        %660 = vmatprep.subr.mxu0 0.0
        %661 = vmatpush1.msra.mxu0 0.0
        %662 = vmatprep.subr.mxu0 0.0
        %663 = vmatpush1.msra.mxu0 0.0
        %664 = vmatprep.subr.mxu0 0.0
        %665 = vmatpush1.msra.mxu0 0.0
        %666 = vmatprep.subr.mxu0 0.0
        %667 = vmatpush1.msra.mxu0 0.0
        %668 = vmatprep.subr.mxu0 0.0
        %669 = vmatpush1.msra.mxu0 0.0
        %670 = vmatprep.subr.mxu0 0.0
        %671 = vmatpush1.msra.mxu0 0.0
        %672 = vmatprep.subr.mxu0 0.0
        %673 = vmatpush1.msra.mxu0 0.0
        %674 = vmatprep.subr.mxu0 0.0
        %675 = vmatpush1.msra.mxu0 0.0
        %676 = vmatprep.subr.mxu0 0.0
        %677 = vmatpush1.msra.mxu0 0.0
        %678 = vmatprep.subr.mxu0 0.0
        %679 = vmatpush1.msra.mxu0 0.0
        %680 = vmatprep.subr.mxu0 0.0
        %681 = vmatpush1.msra.mxu0 0.0
        %682 = vmatprep.subr.mxu0 0.0
        %683 = vmatpush1.msra.mxu0 0.0
        %684 = vmatprep.subr.mxu0 0.0
        %685 = vmatpush1.msra.mxu0 0.0
        %686 = vmatprep.subr.mxu0 0.0
        %687 = vmatpush1.msra.mxu0 0.0
        %688 = vmatprep.subr.mxu0 0.0
        %689 = vmatpush1.msra.mxu0 0.0
        %690 = vmatprep.subr.mxu0 0.0
        %691 = vmatpush1.msra.mxu0 0.0
        %692 = vmatprep.subr.mxu0 0.0
        %693 = vmatpush1.msra.mxu0 0.0
        %694 = vmatprep.subr.mxu0 0.0
        %695 = vmatpush1.msra.mxu0 0.0
        %696 = vmatprep.subr.mxu0 0.0
        %697 = vmatpush1.msra.mxu0 0.0
        %698 = vmatprep.subr.mxu0 0.0
        %699 = vmatpush1.msra.mxu0 0.0
        %700 = vmatprep.subr.mxu0 0.0
        %701 = vmatpush1.msra.mxu0 0.0
        %702 = vmatprep.subr.mxu0 0.0
        %703 = vmatpush1.msra.mxu0 0.0
        %704 = vmatprep.subr.mxu0 0.0
        %705 = vmatpush1.msra.mxu0 0.0
        %706 = vmatprep.subr.mxu0 0.0
        %707 = vmatpush1.msra.mxu0 0.0
        %708 = vmatprep.subr.mxu0 0.0
        %709 = vmatpush1.msra.mxu0 0.0
        %710 = vmatprep.subr.mxu0 0.0
        %711 = vmatpush1.msra.mxu0 0.0
        %712 = vmatprep.subr.mxu0 0.0
        %713 = vmatpush1.msra.mxu0 0.0
        %714 = vmatprep.mubr.f32.mxu0 0.0
        %715 = vmatmul.mubr.f32.gmra.mrb[0].mxu0 %v648
        %v716 = vpop.f32.mrb[0].mxu0
        %v717 = vadd.f32 0.0, %v716
        %v718 = vpop.f32.mrb[0].mxu0
        %719 = vdwg.mxu0
        %720 = vrot.lane.b32.xlu0 %v303, 112
        %v721 = vpop.permute.xlu0 %720
        %722 = vrot.lane.b32.xlu0 %v387, 112
        %v723 = vpop.permute.xlu0 %722
        %v724 = vsel %vm390, %v721, 0
        %v726 = vsel %vm390, %v723, 0
        %728 = vmatprep.subr.mxu0 0.0
        %729 = vmatpush1.xpose.msra.mxu0 %v726
        %730 = vmatprep.subr.mxu0 0.0
        %731 = vmatpush1.xpose.msra.mxu0 0.0
        %732 = vmatprep.subr.mxu0 0.0
        %733 = vmatpush1.xpose.msra.mxu0 0.0
        %734 = vmatprep.subr.mxu0 0.0
        %735 = vmatpush1.xpose.msra.mxu0 0.0
        %736 = vmatprep.subr.mxu0 0.0
        %737 = vmatpush1.xpose.msra.mxu0 0.0
        %738 = vmatprep.subr.mxu0 0.0
        %739 = vmatpush1.xpose.msra.mxu0 0.0
        %740 = vmatprep.subr.mxu0 0.0
        %741 = vmatpush1.xpose.msra.mxu0 0.0
        %742 = vmatprep.subr.mxu0 0.0
        %743 = vmatpush1.xpose.msra.mxu0 0.0
        %744 = vmatprep.subr.mxu0 0.0
        %745 = vmatpush1.xpose.msra.mxu0 0.0
        %746 = vmatprep.subr.mxu0 0.0
        %747 = vmatpush1.xpose.msra.mxu0 0.0
        %748 = vmatprep.subr.mxu0 0.0
        %749 = vmatpush1.xpose.msra.mxu0 0.0
        %750 = vmatprep.subr.mxu0 0.0
        %751 = vmatpush1.xpose.msra.mxu0 0.0
        %752 = vmatprep.subr.mxu0 0.0
        %753 = vmatpush1.xpose.msra.mxu0 0.0
        %754 = vmatprep.subr.mxu0 0.0
        %755 = vmatpush1.xpose.msra.mxu0 0.0
        %756 = vmatprep.subr.mxu0 0.0
        %757 = vmatpush1.xpose.msra.mxu0 0.0
        %758 = vmatprep.subr.mxu0 0.0
        %759 = vmatpush1.xpose.msra.mxu0 0.0
        %760 = vmatprep.subr.mxu0 0.0
        %761 = vmatpush1.xpose.msra.mxu0 0.0
        %762 = vmatprep.subr.mxu0 0.0
        %763 = vmatpush1.xpose.msra.mxu0 0.0
        %764 = vmatprep.subr.mxu0 0.0
        %765 = vmatpush1.xpose.msra.mxu0 0.0
        %766 = vmatprep.subr.mxu0 0.0
        %767 = vmatpush1.xpose.msra.mxu0 0.0
        %768 = vmatprep.subr.mxu0 0.0
        %769 = vmatpush1.xpose.msra.mxu0 0.0
        %770 = vmatprep.subr.mxu0 0.0
        %771 = vmatpush1.xpose.msra.mxu0 0.0
        %772 = vmatprep.subr.mxu0 0.0
        %773 = vmatpush1.xpose.msra.mxu0 0.0
        %774 = vmatprep.subr.mxu0 0.0
        %775 = vmatpush1.xpose.msra.mxu0 0.0
        %776 = vmatprep.subr.mxu0 0.0
        %777 = vmatpush1.xpose.msra.mxu0 0.0
        %778 = vmatprep.subr.mxu0 0.0
        %779 = vmatpush1.xpose.msra.mxu0 0.0
        %780 = vmatprep.subr.mxu0 0.0
        %781 = vmatpush1.xpose.msra.mxu0 0.0
        %782 = vmatprep.subr.mxu0 0.0
        %783 = vmatpush1.xpose.msra.mxu0 0.0
        %784 = vmatprep.subr.mxu0 0.0
        %785 = vmatpush1.xpose.msra.mxu0 0.0
        %786 = vmatprep.subr.mxu0 0.0
        %787 = vmatpush1.xpose.msra.mxu0 0.0
        %788 = vmatprep.subr.mxu0 0.0
        %789 = vmatpush1.xpose.msra.mxu0 0.0
        %790 = vmatprep.subr.mxu0 0.0
        %791 = vmatpush1.xpose.msra.mxu0 0.0
        %792 = vmatprep.mubr.f32.mxu0 0.0
        %793 = vmatmul.mubr.f32.gmra.mrb[0].mxu0 %v724
        %v794 = vpop.f32.mrb[0].mxu0
        %v795 = vadd.f32 0.0, %v794
        %v796 = vpop.f32.mrb[0].mxu0
        %797 = vdwg.mxu0
        %v798 = vsel %vm390, %v795, -inf
        %799 = vmax.xlane.f32.xlu0 %v798
        %v800 = vpop.xlane.xlu0 %799
        %v801 = vsub.f32 %v795, %v800
        %v802 = vmul.f32 %v801, 1.442695
        %v803 = vpow.pop %v802
        %v804 = vsel %vm390, %v803, 0.0
        %805 = vadd.xlane.f32.xlu0 %v804
        %v806 = vpop.xlane.xlu0 %805
        %v807 = vrcp.pop %v806
        %v808 = vmul.f32 %v803, %v807
        %v809 = vadd.f32 %v643, %v808
        %810 = vrot.lane.b32.xlu0 %v387, 80
        %v811 = vpop.permute.xlu0 %810
        %v814 = vsel %vm390, %v808, 0
        %816 = vmatprep.subr.mxu0 0.0
        %817 = vmatpush1.msra.mxu0 %v811
        %818 = vmatprep.subr.mxu0 0.0
        %819 = vmatpush1.msra.mxu0 0.0
        %820 = vmatprep.subr.mxu0 0.0
        %821 = vmatpush1.msra.mxu0 0.0
        %822 = vmatprep.subr.mxu0 0.0
        %823 = vmatpush1.msra.mxu0 0.0
        %824 = vmatprep.subr.mxu0 0.0
        %825 = vmatpush1.msra.mxu0 0.0
        %826 = vmatprep.subr.mxu0 0.0
        %827 = vmatpush1.msra.mxu0 0.0
        %828 = vmatprep.subr.mxu0 0.0
        %829 = vmatpush1.msra.mxu0 0.0
        %830 = vmatprep.subr.mxu0 0.0
        %831 = vmatpush1.msra.mxu0 0.0
        %832 = vmatprep.subr.mxu0 0.0
        %833 = vmatpush1.msra.mxu0 0.0
        %834 = vmatprep.subr.mxu0 0.0
        %835 = vmatpush1.msra.mxu0 0.0
        %836 = vmatprep.subr.mxu0 0.0
        %837 = vmatpush1.msra.mxu0 0.0
        %838 = vmatprep.subr.mxu0 0.0
        %839 = vmatpush1.msra.mxu0 0.0
        %840 = vmatprep.subr.mxu0 0.0
        %841 = vmatpush1.msra.mxu0 0.0
        %842 = vmatprep.subr.mxu0 0.0
        %843 = vmatpush1.msra.mxu0 0.0
        %844 = vmatprep.subr.mxu0 0.0
        %845 = vmatpush1.msra.mxu0 0.0
        %846 = vmatprep.subr.mxu0 0.0
        %847 = vmatpush1.msra.mxu0 0.0
        %848 = vmatprep.subr.mxu0 0.0
        %849 = vmatpush1.msra.mxu0 0.0
        %850 = vmatprep.subr.mxu0 0.0
        %851 = vmatpush1.msra.mxu0 0.0
        %852 = vmatprep.subr.mxu0 0.0
        %853 = vmatpush1.msra.mxu0 0.0
        %854 = vmatprep.subr.mxu0 0.0
        %855 = vmatpush1.msra.mxu0 0.0
        %856 = vmatprep.subr.mxu0 0.0
        %857 = vmatpush1.msra.mxu0 0.0
        %858 = vmatprep.subr.mxu0 0.0
        %859 = vmatpush1.msra.mxu0 0.0
        %860 = vmatprep.subr.mxu0 0.0
        %861 = vmatpush1.msra.mxu0 0.0
        %862 = vmatprep.subr.mxu0 0.0
        %863 = vmatpush1.msra.mxu0 0.0
        %864 = vmatprep.subr.mxu0 0.0
        %865 = vmatpush1.msra.mxu0 0.0
        %866 = vmatprep.subr.mxu0 0.0
        %867 = vmatpush1.msra.mxu0 0.0
        %868 = vmatprep.subr.mxu0 0.0
        %869 = vmatpush1.msra.mxu0 0.0
        %870 = vmatprep.subr.mxu0 0.0
        %871 = vmatpush1.msra.mxu0 0.0
        %872 = vmatprep.subr.mxu0 0.0
        %873 = vmatpush1.msra.mxu0 0.0
        %874 = vmatprep.subr.mxu0 0.0
        %875 = vmatpush1.msra.mxu0 0.0
        %876 = vmatprep.subr.mxu0 0.0
        %877 = vmatpush1.msra.mxu0 0.0
        %878 = vmatprep.subr.mxu0 0.0
        %879 = vmatpush1.msra.mxu0 0.0
        %880 = vmatprep.mubr.f32.mxu0 0.0
        %881 = vmatmul.mubr.f32.gmra.mrb[0].mxu0 %v814
        %v882 = vpop.f32.mrb[0].mxu0
        %v883 = vadd.f32 0.0, %v882
        %v884 = vpop.f32.mrb[0].mxu0
        %885 = vdwg.mxu0
        %886 = vrot.lane.b32.xlu0 %v303, 104
        %v887 = vpop.permute.xlu0 %886
        %888 = vrot.lane.b32.xlu0 %v387, 104
        %v889 = vpop.permute.xlu0 %888
        %v890 = vsel %vm390, %v887, 0
        %v892 = vsel %vm390, %v889, 0
        %894 = vmatprep.subr.mxu0 0.0
        %895 = vmatpush1.xpose.msra.mxu0 %v892
        %896 = vmatprep.subr.mxu0 0.0
        %897 = vmatpush1.xpose.msra.mxu0 0.0
        %898 = vmatprep.subr.mxu0 0.0
        %899 = vmatpush1.xpose.msra.mxu0 0.0
        %900 = vmatprep.subr.mxu0 0.0
        %901 = vmatpush1.xpose.msra.mxu0 0.0
        %902 = vmatprep.subr.mxu0 0.0
        %903 = vmatpush1.xpose.msra.mxu0 0.0
        %904 = vmatprep.subr.mxu0 0.0
        %905 = vmatpush1.xpose.msra.mxu0 0.0
        %906 = vmatprep.subr.mxu0 0.0
        %907 = vmatpush1.xpose.msra.mxu0 0.0
        %908 = vmatprep.subr.mxu0 0.0
        %909 = vmatpush1.xpose.msra.mxu0 0.0
        %910 = vmatprep.subr.mxu0 0.0
        %911 = vmatpush1.xpose.msra.mxu0 0.0
        %912 = vmatprep.subr.mxu0 0.0
        %913 = vmatpush1.xpose.msra.mxu0 0.0
        %914 = vmatprep.subr.mxu0 0.0
        %915 = vmatpush1.xpose.msra.mxu0 0.0
        %916 = vmatprep.subr.mxu0 0.0
        %917 = vmatpush1.xpose.msra.mxu0 0.0
        %918 = vmatprep.subr.mxu0 0.0
        %919 = vmatpush1.xpose.msra.mxu0 0.0
        %920 = vmatprep.subr.mxu0 0.0
        %921 = vmatpush1.xpose.msra.mxu0 0.0
        %922 = vmatprep.subr.mxu0 0.0
        %923 = vmatpush1.xpose.msra.mxu0 0.0
        %924 = vmatprep.subr.mxu0 0.0
        %925 = vmatpush1.xpose.msra.mxu0 0.0
        %926 = vmatprep.subr.mxu0 0.0
        %927 = vmatpush1.xpose.msra.mxu0 0.0
        %928 = vmatprep.subr.mxu0 0.0
        %929 = vmatpush1.xpose.msra.mxu0 0.0
        %930 = vmatprep.subr.mxu0 0.0
        %931 = vmatpush1.xpose.msra.mxu0 0.0
        %932 = vmatprep.subr.mxu0 0.0
        %933 = vmatpush1.xpose.msra.mxu0 0.0
        %934 = vmatprep.subr.mxu0 0.0
        %935 = vmatpush1.xpose.msra.mxu0 0.0
        %936 = vmatprep.subr.mxu0 0.0
        %937 = vmatpush1.xpose.msra.mxu0 0.0
        %938 = vmatprep.subr.mxu0 0.0
        %939 = vmatpush1.xpose.msra.mxu0 0.0
        %940 = vmatprep.subr.mxu0 0.0
        %941 = vmatpush1.xpose.msra.mxu0 0.0
        %942 = vmatprep.subr.mxu0 0.0
        %943 = vmatpush1.xpose.msra.mxu0 0.0
        %944 = vmatprep.subr.mxu0 0.0
        %945 = vmatpush1.xpose.msra.mxu0 0.0
        %946 = vmatprep.subr.mxu0 0.0
        %947 = vmatpush1.xpose.msra.mxu0 0.0
        %948 = vmatprep.subr.mxu0 0.0
        %949 = vmatpush1.xpose.msra.mxu0 0.0
        %950 = vmatprep.subr.mxu0 0.0
        %951 = vmatpush1.xpose.msra.mxu0 0.0
        %952 = vmatprep.subr.mxu0 0.0
        %953 = vmatpush1.xpose.msra.mxu0 0.0
        %954 = vmatprep.subr.mxu0 0.0
        %955 = vmatpush1.xpose.msra.mxu0 0.0
        %956 = vmatprep.subr.mxu0 0.0
        %957 = vmatpush1.xpose.msra.mxu0 0.0
        %958 = vmatprep.mubr.f32.mxu0 0.0
        %959 = vmatmul.mubr.f32.gmra.mrb[0].mxu0 %v890
        %v960 = vpop.f32.mrb[0].mxu0
        %v961 = vadd.f32 0.0, %v960
        %v962 = vpop.f32.mrb[0].mxu0
        %963 = vdwg.mxu0
        %v964 = vsel %vm390, %v961, -inf
        %965 = vmax.xlane.f32.xlu0 %v964
        %v966 = vpop.xlane.xlu0 %965
        %v967 = vsub.f32 %v961, %v966
        %v968 = vmul.f32 %v967, 1.442695
        %v969 = vpow.pop %v968
        %v970 = vsel %vm390, %v969, 0.0
        %971 = vadd.xlane.f32.xlu0 %v970
        %v972 = vpop.xlane.xlu0 %971
        %v973 = vrcp.pop %v972
        %v974 = vmul.f32 %v969, %v973
        %v975 = vadd.f32 %v809, %v974
        %976 = vrot.lane.b32.xlu0 %v387, 72
        %v977 = vpop.permute.xlu0 %976
        %v980 = vsel %vm390, %v974, 0
        %982 = vmatprep.subr.mxu0 0.0
        %983 = vmatpush1.msra.mxu0 %v977
        %984 = vmatprep.subr.mxu0 0.0
        %985 = vmatpush1.msra.mxu0 0.0
        %986 = vmatprep.subr.mxu0 0.0
        %987 = vmatpush1.msra.mxu0 0.0
        %988 = vmatprep.subr.mxu0 0.0
        %989 = vmatpush1.msra.mxu0 0.0
        %990 = vmatprep.subr.mxu0 0.0
        %991 = vmatpush1.msra.mxu0 0.0
        %992 = vmatprep.subr.mxu0 0.0
        %993 = vmatpush1.msra.mxu0 0.0
        %994 = vmatprep.subr.mxu0 0.0
        %995 = vmatpush1.msra.mxu0 0.0
        %996 = vmatprep.subr.mxu0 0.0
        %997 = vmatpush1.msra.mxu0 0.0
        %998 = vmatprep.subr.mxu0 0.0
        %999 = vmatpush1.msra.mxu0 0.0
        %1000 = vmatprep.subr.mxu0 0.0
        %1001 = vmatpush1.msra.mxu0 0.0
        %1002 = vmatprep.subr.mxu0 0.0
        %1003 = vmatpush1.msra.mxu0 0.0
        %1004 = vmatprep.subr.mxu0 0.0
        %1005 = vmatpush1.msra.mxu0 0.0
        %1006 = vmatprep.subr.mxu0 0.0
        %1007 = vmatpush1.msra.mxu0 0.0
        %1008 = vmatprep.subr.mxu0 0.0
        %1009 = vmatpush1.msra.mxu0 0.0
        %1010 = vmatprep.subr.mxu0 0.0
        %1011 = vmatpush1.msra.mxu0 0.0
        %1012 = vmatprep.subr.mxu0 0.0
        %1013 = vmatpush1.msra.mxu0 0.0
        %1014 = vmatprep.subr.mxu0 0.0
        %1015 = vmatpush1.msra.mxu0 0.0
        %1016 = vmatprep.subr.mxu0 0.0
        %1017 = vmatpush1.msra.mxu0 0.0
        %1018 = vmatprep.subr.mxu0 0.0
        %1019 = vmatpush1.msra.mxu0 0.0
        %1020 = vmatprep.subr.mxu0 0.0
        %1021 = vmatpush1.msra.mxu0 0.0
        %1022 = vmatprep.subr.mxu0 0.0
        %1023 = vmatpush1.msra.mxu0 0.0
        %1024 = vmatprep.subr.mxu0 0.0
        %1025 = vmatpush1.msra.mxu0 0.0
        %1026 = vmatprep.subr.mxu0 0.0
        %1027 = vmatpush1.msra.mxu0 0.0
        %1028 = vmatprep.subr.mxu0 0.0
        %1029 = vmatpush1.msra.mxu0 0.0
        %1030 = vmatprep.subr.mxu0 0.0
        %1031 = vmatpush1.msra.mxu0 0.0
        %1032 = vmatprep.subr.mxu0 0.0
        %1033 = vmatpush1.msra.mxu0 0.0
        %1034 = vmatprep.subr.mxu0 0.0
        %1035 = vmatpush1.msra.mxu0 0.0
        %1036 = vmatprep.subr.mxu0 0.0
        %1037 = vmatpush1.msra.mxu0 0.0
        %1038 = vmatprep.subr.mxu0 0.0
        %1039 = vmatpush1.msra.mxu0 0.0
        %1040 = vmatprep.subr.mxu0 0.0
        %1041 = vmatpush1.msra.mxu0 0.0
        %1042 = vmatprep.subr.mxu0 0.0
        %1043 = vmatpush1.msra.mxu0 0.0
        %1044 = vmatprep.subr.mxu0 0.0
        %1045 = vmatpush1.msra.mxu0 0.0
        %1046 = vmatprep.mubr.f32.mxu0 0.0
        %1047 = vmatmul.mubr.f32.gmra.mrb[0].mxu0 %v980
        %v1048 = vpop.f32.mrb[0].mxu0
        %v1049 = vadd.f32 0.0, %v1048
        %v1050 = vpop.f32.mrb[0].mxu0
        %1051 = vdwg.mxu0
        %1053 = vrot.lane.b32.xlu0 %v717, 8
        %v1054 = vpop.permute.xlu0 %1053
        %1057 = vrot.lane.b32.xlu0 %v883, 16
        %v1058 = vpop.permute.xlu0 %1057
        %1061 = vrot.lane.b32.xlu0 %v1049, 24
        %v1062 = vpop.permute.xlu0 %1061
        %v1064 = vsel %vm390, %v551, %v1054
        %vm1065 = vcmask 130048
        %v1066 = vsel %vm1065, %v1064, %v1058
        %vm1067 = vcmask 195584
        %v1068 = vsel %vm1067, %v1066, %v1062
        %1069 = vst.msk [vmem:[%s294] sm:$0xff] %vm316, %v1068
        %v1070 = vmul.f32 %v975, 0.25
        %1071 = vst.msk [vmem:[%s301] sm:$0xff] %vm390, %v1070
        %s1072 = sand.u32 %s131, 1
        %s1073 = scalar_lea.sflag [#allocation4], %s1072
        %s1074 = sand.u32 %s131, 1
        %s1075 = smul.addr %s1074, 8
        %s1076 = scalar_lea.vmem [#allocation8], %s1075
        %s1077 = sand.u32 %s157, 1
        %s1078 = scalar_lea.sflag [#allocation10], %s1077
        %s1079 = sand.u32 %s157, 1
        %s1080 = smul.addr %s1079, 8
        %s1081 = scalar_lea.vmem [#allocation9], %s1080
        // Predicated region
        $region49: #{tpu_custom_call.1} parent=35 // pred_check
          %p1082 = pneg %p141
        $region50: #{tpu_custom_call.1} parent=35 // pred_check_branch
          %1084 = sbr.rel (%p1082) target = $region52
        $region51: #{tpu_custom_call.1} parent=35 // pred_region
          %s1086 = ssub.s32 128, 128
          %1087 = vsyncadd %s1073, %s1086
          %s1088 = smul.addr %s29, 128
          %s1089 = scalar_lea.hbm %s4, %s1088
          %s1091 = sshll.u32 %s1076, 4
          %s1092 = int_to_ptr.vmem [resolvable:$true] %s1091
          %1094 = dma.vmem_to_hbm [thread:$0]  %s1092, 128, %s1089, %s1073
        $region52: #{tpu_custom_call.1} parent=35 // pred_fallthru
          _
        // Predicated region
        $region53: #{tpu_custom_call.1} parent=35 // pred_check
          %p1095 = pneg %p167
        $region54: #{tpu_custom_call.1} parent=35 // pred_check_branch
          %1097 = sbr.rel (%p1095) target = $region56
        $region55: #{tpu_custom_call.1} parent=35 // pred_region
          %s1099 = ssub.s32 128, 128
          %1100 = vsyncadd %s1078, %s1099
          %s1101 = smul.addr %s29, 128
          %s1102 = scalar_lea.hbm %s5, %s1101
          %s1104 = sshll.u32 %s1081, 4
          %s1105 = int_to_ptr.vmem [resolvable:$true] %s1104
          %1107 = dma.vmem_to_hbm [thread:$0]  %s1105, 128, %s1102, %s1078
        $region56: #{tpu_custom_call.1} parent=35 // pred_fallthru
          _
      $region36: #{tpu_custom_call.1} parent=5 // pred_fallthru
        _
      %p1108 = scmp.le.s32.totalorder 2, %s24
      // Predicated region
      $region57: #{tpu_custom_call.1} parent=5 // pred_check
        %p1109 = pneg %p1108
      $region58: #{tpu_custom_call.1} parent=5 // pred_check_branch
        %1111 = sbr.rel (%p1109) target = $region60
      $region59: #{tpu_custom_call.1} parent=5 // pred_region
        %s1112 = ssub.s32 %s24, 2
        // Predicated region
        $region61: #{tpu_custom_call.1} parent=59 // pred_check
          %p1113 = pneg %p147
        $region62: #{tpu_custom_call.1} parent=59 // pred_check_branch
          %1115 = sbr.rel (%p1113) target = $region64
        $region63: #{tpu_custom_call.1} parent=59 // pred_region
          %s1116 = sand.u32 %s132, 1
          %s1117 = scalar_lea.sflag [#allocation4], %s1116
          %s1118 = sand.u32 %s132, 1
          %s1119 = smul.addr %s1118, 8
          %s1120 = scalar_lea.vmem [#allocation8], %s1119
          %1121 = dma.done %s1117, 128
        $region64: #{tpu_custom_call.1} parent=59 // pred_fallthru
          _
        // Predicated region
        $region65: #{tpu_custom_call.1} parent=59 // pred_check
          %p1122 = pneg %p173
        $region66: #{tpu_custom_call.1} parent=59 // pred_check_branch
          %1124 = sbr.rel (%p1122) target = $region68
        $region67: #{tpu_custom_call.1} parent=59 // pred_region
          %s1125 = sand.u32 %s158, 1
          %s1126 = scalar_lea.sflag [#allocation10], %s1125
          %s1127 = sand.u32 %s158, 1
          %s1128 = smul.addr %s1127, 8
          %s1129 = scalar_lea.vmem [#allocation9], %s1128
          %1130 = dma.done %s1126, 128
        $region68: #{tpu_custom_call.1} parent=59 // pred_fallthru
          _
      $region60: #{tpu_custom_call.1} parent=5 // pred_fallthru
        _
    $region6: #{tpu_custom_call.1} parent=1 // loop_footer
      %s28 = sadd.s32 1, %s24
    $region7: #{tpu_custom_call.1} parent=1 // loop_footer_branch
      %23 = sbr.rel target = $region3
    $region8: #{tpu_custom_call.1} parent=1 // loop_exit
      _
    %1131 = vsyncpa [#allocation3], 1
    %s1132 = scalar_lea.sflag [#allocation3], 1
    %1133 = vsyncpa %s1132, 1
    %1134 = vsyncpa [#allocation6], 1
    %s1135 = scalar_lea.sflag [#allocation6], 1
    %1136 = vsyncpa %s1135, 1
    %1137 = vsyncpa [#allocation4], 1
    %s1138 = scalar_lea.sflag [#allocation4], 1
    %1139 = vsyncpa %s1138, 1
    %1140 = vsyncpa [#allocation10], 1
    %s1141 = scalar_lea.sflag [#allocation10], 1
    %1142 = vsyncpa %s1141, 1

</llo_original>
